<compile_context>
chip_gen: v7x
topology: tpu7x:2x2x1
jax: 0.10.0
libtpu: 0.0.40
codegen_flags: <defaults>
</compile_context>

<pallas_src>
import functools

import jax
import jax.numpy as jnp
from jax.experimental import pallas as pl
from jax.experimental.pallas import tpu as pltpu

_SUBLANE = 8
_LANE = 128
_MAX_TILE_ROWS = 8192           # 8192 x 128 x 4B = 4 MiB f32 block (2 MiB bf16)
_MAX_PARTIALS = 8               # independent (8,128) accumulators per core
_SMALL_NUMEL = 1 << 16          # below this, fused jnp beats kernel launch cost
_VMEM_LIMIT_BYTES = 32 * 1024 * 1024


def _loss_term(x_f32, label, use_lsgan):
    """Elementwise loss term (pre-mean), matching nn.MSELoss / nn.BCELoss."""
    t = jnp.float32(label)
    if use_lsgan:
        d = x_f32 - t
        return d * d
    # nn.BCELoss clamps log at -100; specialize on the compile-time label so the
    # common 0/1 labels emit a single EUP log per element.
    if label == 1.0:
        return -jnp.maximum(jnp.log(x_f32), -100.0)
    if label == 0.0:
        return -jnp.maximum(jnp.log(1.0 - x_f32), -100.0)
    return -(t * jnp.maximum(jnp.log(x_f32), -100.0)
             + (1.0 - t) * jnp.maximum(jnp.log(1.0 - x_f32), -100.0))


def _row_granularity(dtype):
    """Rows per native sublane tile for this dtype (8 f32 / 16 bf16 / 32 int8)."""
    itemsize = jnp.dtype(dtype).itemsize
    if itemsize >= 4:
        return 8
    if itemsize == 2:
        return 16
    return 32


@functools.lru_cache(maxsize=None)
def _detect_tensorcores():
    """TensorCores per chip: 2 only when confidently detected (v7x), else 1."""
    if not hasattr(pltpu, "CORE_PARALLEL"):
        return 1
    try:
        info = pltpu.get_tpu_info()
    except Exception:
        return 1
    for name in ("num_tensorcores", "tensorcores_per_chip",
                 "num_tensor_cores", "num_cores_per_chip"):
        v = getattr(info, name, None)
        if isinstance(v, int) and v >= 1:
            return min(int(v), 2)
    return 1   # conservative default: single-TC codegen is never wrong, only slower


def _gan_loss_kernel(x_ref, o_ref, *, label, use_lsgan, rows, tile_rows,
                     n_parts, any_masked, first_masked_blk):
    """Per-block loss term, reduced to n_parts independent (8,128) partials."""
    c = pl.program_id(0)                    # core slice (size 1 unless 2-TC chip)
    i = pl.program_id(1)                    # block within this core's range
    bpc = pl.num_programs(1)

    @pl.when(i == 0)
    def _():
        o_ref[...] = jnp.zeros_like(o_ref)

    x = x_ref[...].astype(jnp.float32)      # cast in-kernel; HBM stays narrow
    tr = x.shape[0]
    term = _loss_term(x, label, use_lsgan)

    def _accum(t):
        # (tile_rows,128) -> n_parts independent (8,128) partials: pure VPU adds
        # with ILP across accumulators, hidden under the input DMA.
        o_ref[...] += t.reshape(tr // (_SUBLANE * n_parts), n_parts,
                                _SUBLANE, _LANE).sum(axis=0)[None]

    if not any_masked:
        _accum(term)                        # fully-aligned case: no mask anywhere
    else:
        blk = c * bpc + i                   # logical global block index
        needs_mask = blk >= first_masked_blk

        @pl.when(jnp.logical_not(needs_mask))
        def _():                            # interior block: no iota/select cost
            _accum(term)

        @pl.when(needs_mask)
        def _():                            # ragged edge / clamped duplicate block
            # int32 is safe here: indices stay in row units (numel/128), not
            # element units, so no overflow below ~2^31 * 128 elements.
            row = (blk * tile_rows
                   + jax.lax.broadcasted_iota(jnp.int32, term.shape, 0))
            _accum(jnp.where(row < rows, term, 0.0))


def gan_loss(output, target_is_real, *, real_label=1.0, fake_label=0.0,
             use_lsgan=True, min_pallas_numel=_SMALL_NUMEL, tpu_cores=None):
    """JAX/Pallas equivalent of GANLoss.forward(output, target_is_real)."""
    label = float(real_label) if target_is_real else float(fake_label)

    flat = output.reshape(-1)               # keep original dtype; cast in-kernel
    numel = flat.shape[0]

    # Small-input fast path: PatchGAN-sized outputs are a few KB; XLA's fused
    # elementwise+reduce beats the fixed kernel-launch / grid-step overhead.
    if numel < max(int(min_pallas_numel), 1):
        term = _loss_term(flat.astype(jnp.float32), label, use_lsgan)
        return jnp.sum(term) / jnp.float32(numel)

    # Aligned prefix goes through the kernel (no jnp.pad copy); the small tail
    # (< one native tile) is summed in plain JAX in the epilogue.
    g_rows = _row_granularity(flat.dtype)
    granule = g_rows * _LANE
    aligned = (numel // granule) * granule
    rem = numel - aligned
    if aligned == 0:                        # only reachable with a tiny override
        term = _loss_term(flat.astype(jnp.float32), label, use_lsgan)
        return jnp.sum(term) / jnp.float32(numel)

    rows = aligned // _LANE                 # multiple of g_rows (native layout)
    x2 = (flat[:aligned] if rem else flat).reshape(rows, _LANE)

    tile_rows = min(_MAX_TILE_ROWS, rows)   # multiple of g_rows
    nblk = pl.cdiv(rows, tile_rows)

    # Core split: only engage a 2nd TensorCore when CORE_PARALLEL semantics are
    # available and the chip actually has two TCs; otherwise the extra axis is
    # pure overhead (duplicate DMA + masked VPU work).
    n_cores = _detect_tensorcores() if tpu_cores is None else int(tpu_cores)
    if not hasattr(pltpu, "CORE_PARALLEL"):
        n_cores = 1
    n_cores = max(1, min(n_cores, 2, nblk))
    bpc = pl.cdiv(nblk, n_cores)            # blocks per core

    # Widest accumulator count that divides the tile.
    n_parts = 1
    for p in (_MAX_PARTIALS, 4, 2, 1):
        if tile_rows % (_SUBLANE * p) == 0:
            n_parts = p
            break

    ragged_last = (rows % tile_rows) != 0
    any_masked = ragged_last or (n_cores * bpc > nblk)
    first_masked_blk = (nblk - 1) if ragged_last else nblk

    kernel = functools.partial(
        _gan_loss_kernel, label=label, use_lsgan=use_lsgan, rows=rows,
        tile_rows=tile_rows, n_parts=n_parts, any_masked=any_masked,
        first_masked_blk=first_masked_blk)

    def in_map(c, i):
        # Clamp so a (possible) extra block on the last core never indexes past
        # the array; its contribution is fully masked in the kernel.
        return (jnp.minimum(c * bpc + i, nblk - 1), 0)

    if n_cores >= 2:
        dim_sem = (pltpu.CORE_PARALLEL, pltpu.ARBITRARY)
    else:
        dim_sem = (pltpu.ARBITRARY, pltpu.ARBITRARY)

    itemsize = jnp.dtype(flat.dtype).itemsize
    if use_lsgan:
        flops, transc = 2 * aligned, 0
    elif label in (0.0, 1.0):
        flops, transc = 3 * aligned, aligned
    else:
        flops, transc = 8 * aligned, 2 * aligned

    partials = pl.pallas_call(
        kernel,
        out_shape=jax.ShapeDtypeStruct(
            (n_cores, n_parts, _SUBLANE, _LANE), jnp.float32),
        grid_spec=pltpu.PrefetchScalarGridSpec(
            num_scalar_prefetch=0,
            grid=(n_cores, bpc),
            in_specs=[pl.BlockSpec((tile_rows, _LANE), in_map)],
            out_specs=pl.BlockSpec((1, n_parts, _SUBLANE, _LANE),
                                   lambda c, i: (c, 0, 0, 0)),
        ),
        compiler_params=pltpu.CompilerParams(
            dimension_semantics=dim_sem,
            vmem_limit_bytes=_VMEM_LIMIT_BYTES),
        cost_estimate=pl.CostEstimate(
            flops=flops, transcendentals=transc,
            bytes_accessed=aligned * itemsize
            + n_cores * n_parts * _SUBLANE * _LANE * 4),
    )(x2)

    total = jnp.sum(partials)
    if rem:
        tail = flat[aligned:].astype(jnp.float32)
        total = total + jnp.sum(_loss_term(tail, label, use_lsgan))
    return total / jnp.float32(numel)


class GANLoss:
    """Mirror of the PyTorch module's interface (no learnable params).

    The PyTorch module lazily builds/caches a constant target tensor; here the
    label is a compile-time scalar folded into the kernel.
    """

    def __init__(self, real_label=1.0, fake_label=0.0, use_lsgan=True):
        self.real_label = real_label
        self.fake_label = fake_label
        self.use_lsgan = use_lsgan

    def __call__(self, output, target_is_real):
        return gan_loss(output, target_is_real,
                        real_label=self.real_label,
                        fake_label=self.fake_label,
                        use_lsgan=self.use_lsgan)


if __name__ == "__main__":
    key = jax.random.PRNGKey(0)
    k1, k2, k3, k4, k5 = jax.random.split(key, 5)

    mse = GANLoss(1.0, 0.0, use_lsgan=True)
    bce = GANLoss(1.0, 0.0, use_lsgan=False)
    bce_smooth = GANLoss(0.9, 0.1, use_lsgan=False)

    checks = {}

    # Small PatchGAN-style output -> fast path (fused jnp, no kernel launch).
    xs = jax.random.uniform(k1, (2, 4, 16, 16), jnp.float32, 0.01, 0.99)
    checks["small_mse_real"] = (mse(xs, True), jnp.mean((xs - 1.0) ** 2))
    checks["small_mse_fake"] = (mse(xs, False), jnp.mean(xs ** 2))
    checks["small_bce_real"] = (bce(xs, True), jnp.mean(-jnp.log(xs)))

    # Larger outputs -> Pallas streaming-reduction path (numel % 1024 == 0).
    xb = jax.random.uniform(k2, (2, 4, 128, 128), jnp.float32, 0.01, 0.99)
    checks["mse_real"] = (mse(xb, True), jnp.mean((xb - 1.0) ** 2))
    checks["bce_real"] = (bce(xb, True), jnp.mean(-jnp.log(xb)))
    checks["bce_smooth_real"] = (
        bce_smooth(xb, True),
        jnp.mean(-(0.9 * jnp.log(xb) + 0.1 * jnp.log(1.0 - xb))))

    # Ragged numel (not a multiple of 1024): aligned-prefix kernel + jnp tail.
    xr = jax.random.uniform(k3, (2, 3, 129, 129), jnp.float32, 0.01, 0.99)
    checks["mse_real_ragged"] = (mse(xr, True), jnp.mean((xr - 1.0) ** 2))
    checks["bce_smooth_ragged"] = (
        bce_smooth(xr, True),
        jnp.mean(-(0.9 * jnp.log(xr) + 0.1 * jnp.log(1.0 - xr))))

    # bf16 input: HBM bytes halved, f32 cast happens in-kernel.
    xh = jax.random.uniform(k4, (2, 4, 128, 128), jnp.float32,
                            0.01, 0.99).astype(jnp.bfloat16)
    checks["mse_real_bf16"] = (
        mse(xh, True), jnp.mean((xh.astype(jnp.float32) - 1.0) ** 2))

    # Multi-block grid: exercises cross-step accumulation + gated edge mask.
    xm = jax.random.uniform(k5, (2, 4, 384, 384), jnp.float32, 0.01, 0.99)
    checks["mse_real_multiblock"] = (mse(xm, True), jnp.mean((xm - 1.0) ** 2))

    jax.block_until_ready({k: v[0] for k, v in checks.items()})
    for name, (got, ref) in checks.items():
        assert jnp.allclose(got, ref, rtol=5e-5, atol=1e-6), \
            (name, float(got), float(ref))

    print("KERNEL_OK")
</pallas_src>

<mosaic_0001>
module attributes {stable_mosaic.version = 11 : i64} {
  func.func @_gan_loss_kernel(%arg0: i32, %arg1: i32, %arg2: memref<1024x128xf32, #tpu.memory_space<vmem>>, %arg3: memref<1x8x8x128xf32, #tpu.memory_space<vmem>>) attributes {dimension_semantics = [#tpu.dimension_semantics<arbitrary>, #tpu.dimension_semantics<arbitrary>], iteration_bounds = array<i64: 1, 1>, scalar_prefetch = 0 : i64, scratch_operands = 0 : i64, tpu.core_type = #tpu.core_type<tc>, window_params = [{transform_indices = @transform_0, window_bounds = array<i64: 1024, 128>}, {transform_indices = @transform_1, window_bounds = array<i64: 1, 8, 8, 128>}]} {
    %c0_i32 = arith.constant 0 : i32
    %0 = arith.cmpi eq, %arg1, %c0_i32 : i32
    %1 = arith.extui %0 : i1 to i32
    %c0_i32_0 = arith.constant 0 : i32
    %2 = arith.cmpi ne, %1, %c0_i32_0 : i32
    scf.if %2 {
      %cst_11 = arith.constant 0.000000e+00 : f32
      %13 = vector.broadcast %cst_11 : f32 to vector<1x8x8x128xf32>
      %c0_12 = arith.constant 0 : index
      %c0_13 = arith.constant 0 : index
      %c0_14 = arith.constant 0 : index
      %c0_15 = arith.constant 0 : index
      %14 = vector.load %arg3[%c0_12, %c0_13, %c0_14, %c0_15] : memref<1x8x8x128xf32, #tpu.memory_space<vmem>>, vector<1x8x8x128xf32>
      tpu.vector_store %arg3[%c0_12, %c0_13, %c0_14, %c0_15], %13 {strides = array<i32>} : memref<1x8x8x128xf32, #tpu.memory_space<vmem>>, vector<1x8x8x128xf32>,
    } else {
    }
    %c0 = arith.constant 0 : index
    %c0_1 = arith.constant 0 : index
    %3 = vector.load %arg2[%c0, %c0_1] : memref<1024x128xf32, #tpu.memory_space<vmem>>, vector<1024x128xf32>
    %cst = arith.constant 1.000000e+00 : f32
    %4 = vector.broadcast %cst : f32 to vector<1024x128xf32>
    %5 = arith.subf %3, %4 : vector<1024x128xf32>
    %6 = arith.mulf %5, %5 : vector<1024x128xf32>
    %c0_2 = arith.constant 0 : index
    %c0_3 = arith.constant 0 : index
    %c0_4 = arith.constant 0 : index
    %c0_5 = arith.constant 0 : index
    %7 = vector.load %arg3[%c0_2, %c0_3, %c0_4, %c0_5] : memref<1x8x8x128xf32, #tpu.memory_space<vmem>>, vector<1x8x8x128xf32>
    %8 = vector.shape_cast %6 : vector<1024x128xf32> to vector<16x8x8x128xf32>
    %cst_6 = arith.constant dense<0.000000e+00> : vector<8x8x128xf32>
    %9 = vector.multi_reduction <add>, %8, %cst_6 [0] : vector<16x8x8x128xf32> to vector<8x8x128xf32>
    %10 = vector.shape_cast %9 : vector<8x8x128xf32> to vector<1x8x8x128xf32>
    %11 = arith.addf %7, %10 : vector<1x8x8x128xf32>
    %c0_7 = arith.constant 0 : index
    %c0_8 = arith.constant 0 : index
    %c0_9 = arith.constant 0 : index
    %c0_10 = arith.constant 0 : index
    %12 = vector.load %arg3[%c0_7, %c0_8, %c0_9, %c0_10] : memref<1x8x8x128xf32, #tpu.memory_space<vmem>>, vector<1x8x8x128xf32>
    tpu.vector_store %arg3[%c0_7, %c0_8, %c0_9, %c0_10], %11 {strides = array<i32>} : memref<1x8x8x128xf32, #tpu.memory_space<vmem>>, vector<1x8x8x128xf32>,
    return
  }
  func.func @transform_0(%arg0: i32, %arg1: i32) -> (i32, i32) {
    %c1_i32 = arith.constant 1 : i32
    %0 = arith.muli %arg0, %c1_i32 : i32
    %1 = arith.addi %0, %arg1 : i32
    %c0_i32 = arith.constant 0 : i32
    %2 = arith.minsi %1, %c0_i32 : i32
    %c0_i32_0 = arith.constant 0 : i32
    %c0_i32_1 = arith.constant 0 : i32
    return %2, %c0_i32_0 : i32, i32
  }
  func.func @transform_1(%arg0: i32, %arg1: i32) -> (i32, i32, i32, i32) {
    %c0_i32 = arith.constant 0 : i32
    %c0_i32_0 = arith.constant 0 : i32
    %c0_i32_1 = arith.constant 0 : i32
    %c0_i32_2 = arith.constant 0 : i32
    return %arg0, %c0_i32, %c0_i32_0, %c0_i32_1 : i32, i32, i32, i32
  }
}

</mosaic_0001>

<llo_original>
// kernel: tpu_custom_call.1
$region0: #{tpu_custom_call.1}
  #allocation0 [shape = 'u32[]', space=smem, size = 0x4, offset = 0x4, fixed_abs, tag = 'smem constant byte address 0x4 - core index']
  #allocation1 [shape = 'u32[144,128]{1,0:T(1,128)}', space=vmem, size = 0x12000, scoped, tag = 'internal scratch']
  %s0 = inlined_call_operand.hbm [shape: f32[1024,128], index: 0, kind: input, shape index: {}]
  %s1 = inlined_call_operand.hbm [shape: f32[1,8,8,128], index: 1, kind: output, shape index: {}]
  %s2 = sld [smem:[#allocation0]]
  $region22: #{tpu_custom_call.1} parent=0
    _
  %s4 = ssub.s32 1, %s2
  %s5 = scalar_select 0, %s4, %s2
  $region1: #{tpu_custom_call.1} parent=0
    #allocation2 [shape = 'u8[524288]{0}', space=vmem, size = 0x80000, scoped, tag = 'input window, operand 0, single buffered']
    #allocation3 [shape = 's32[1]{0}', space=sflag, size = 0x4, scoped, tag = 'scoped memory for tpu_custom_call.1']
    #allocation4 [shape = 's32[1]{0}', space=sflag, size = 0x4, scoped, tag = 'scoped memory for tpu_custom_call.1']
    #allocation5 [shape = 'u8[32768]{0}', space=vmem, size = 0x8000, scoped, tag = 'output window, operand 0, single buffered']
    %6 = vsyncpa [#allocation3], 0
    %7 = vsyncpa [#allocation4], 0
    // Predicated region
    $region2: #{tpu_custom_call.1} parent=1 // pred_check
      _
    $region3: #{tpu_custom_call.1} parent=1 // pred_check_branch
      %9 = sbr.rel (0) target = $region5
    $region4: #{tpu_custom_call.1} parent=1 // pred_region
      %s10 = sadd.s32 0, 0
      %p11 = scmp.lt.s32.totalorder %s10, 0
      %s12 = scalar_select %p11, %s10, 0
      %s13 = smul.u32 128, %s12
      %s15 = ssub.s32 16384, 16384
      %16 = vsyncadd [#allocation3], %s15
      %s17 = smul.addr %s13, 128
      %s18 = scalar_lea.hbm %s0, %s17
      %s19 = sshll.u32 [#allocation2], 4
      %s20 = int_to_ptr.vmem [resolvable:$true] %s19
      %25 = dma.hbm_to_vmem [thread:$0]  %s18, 16384, %s20, [#allocation3], 128, 128, 8
    $region5: #{tpu_custom_call.1} parent=1 // pred_fallthru
      _
    // Predicated region
    $region6: #{tpu_custom_call.1} parent=1 // pred_check
      _
    $region7: #{tpu_custom_call.1} parent=1 // pred_check_branch
      %27 = sbr.rel (0) target = $region9
    $region8: #{tpu_custom_call.1} parent=1 // pred_region
      %28 = dma.done [#allocation3], 16384
    $region9: #{tpu_custom_call.1} parent=1 // pred_fallthru
      _
    %s29 = sadd.s32 0, 0
    %p30 = scmp.lt.s32.totalorder %s29, 0
    %s31 = scalar_select %p30, %s29, 0
    %s32 = smul.u32 128, %s31
    %p33 = scmp.eq.s32.totalorder 0, 0
    // Predicated region
    $region10: #{tpu_custom_call.1} parent=1 // pred_check
      %p34 = pneg %p33
    $region11: #{tpu_custom_call.1} parent=1 // pred_check_branch
      %36 = sbr.rel (%p34) target = $region13
    $region12: #{tpu_custom_call.1} parent=1 // pred_region
      %37 = vst [vmem:[#allocation5] sm:$0xff] 0.0
      %38 = vst [vmem:[#allocation5 + $0x8] sm:$0xff] 0.0
      %39 = vst [vmem:[#allocation5 + $0x10] sm:$0xff] 0.0
      %40 = vst [vmem:[#allocation5 + $0x18] sm:$0xff] 0.0
      %41 = vst [vmem:[#allocation5 + $0x20] sm:$0xff] 0.0
      %42 = vst [vmem:[#allocation5 + $0x28] sm:$0xff] 0.0
      %43 = vst [vmem:[#allocation5 + $0x30] sm:$0xff] 0.0
      %44 = vst [vmem:[#allocation5 + $0x38] sm:$0xff] 0.0
    $region13: #{tpu_custom_call.1} parent=1 // pred_fallthru
      _
    %v45 = vld [vmem:[#allocation2] sm:$0xff]
    %v46 = vld [vmem:[#allocation2 + $0x8] sm:$0xff]
    %v47 = vld [vmem:[#allocation2 + $0x10] sm:$0xff]
    %v48 = vld [vmem:[#allocation2 + $0x18] sm:$0xff]
    %v49 = vld [vmem:[#allocation2 + $0x20] sm:$0xff]
    %v50 = vld [vmem:[#allocation2 + $0x28] sm:$0xff]
    %v51 = vld [vmem:[#allocation2 + $0x30] sm:$0xff]
    %v52 = vld [vmem:[#allocation2 + $0x38] sm:$0xff]
    %v53 = vld [vmem:[#allocation2 + $0x40] sm:$0xff]
    %v54 = vld [vmem:[#allocation2 + $0x48] sm:$0xff]
    %v55 = vld [vmem:[#allocation2 + $0x50] sm:$0xff]
    %v56 = vld [vmem:[#allocation2 + $0x58] sm:$0xff]
    %v57 = vld [vmem:[#allocation2 + $0x60] sm:$0xff]
    %v58 = vld [vmem:[#allocation2 + $0x68] sm:$0xff]
    %v59 = vld [vmem:[#allocation2 + $0x70] sm:$0xff]
    %v60 = vld [vmem:[#allocation2 + $0x78] sm:$0xff]
    %v61 = vld [vmem:[#allocation2 + $0x80] sm:$0xff]
    %v62 = vld [vmem:[#allocation2 + $0x88] sm:$0xff]
    %v63 = vld [vmem:[#allocation2 + $0x90] sm:$0xff]
    %v64 = vld [vmem:[#allocation2 + $0x98] sm:$0xff]
    %v65 = vld [vmem:[#allocation2 + $0xa0] sm:$0xff]
    %v66 = vld [vmem:[#allocation2 + $0xa8] sm:$0xff]
    %v67 = vld [vmem:[#allocation2 + $0xb0] sm:$0xff]
    %v68 = vld [vmem:[#allocation2 + $0xb8] sm:$0xff]
    %v69 = vld [vmem:[#allocation2 + $0xc0] sm:$0xff]
    %v70 = vld [vmem:[#allocation2 + $0xc8] sm:$0xff]
    %v71 = vld [vmem:[#allocation2 + $0xd0] sm:$0xff]
    %v72 = vld [vmem:[#allocation2 + $0xd8] sm:$0xff]
    %v73 = vld [vmem:[#allocation2 + $0xe0] sm:$0xff]
    %v74 = vld [vmem:[#allocation2 + $0xe8] sm:$0xff]
    %v75 = vld [vmem:[#allocation2 + $0xf0] sm:$0xff]
    %v76 = vld [vmem:[#allocation2 + $0xf8] sm:$0xff]
    %v77 = vld [vmem:[#allocation2 + $0x100] sm:$0xff]
    %v78 = vld [vmem:[#allocation2 + $0x108] sm:$0xff]
    %v79 = vld [vmem:[#allocation2 + $0x110] sm:$0xff]
    %v80 = vld [vmem:[#allocation2 + $0x118] sm:$0xff]
    %v81 = vld [vmem:[#allocation2 + $0x120] sm:$0xff]
    %v82 = vld [vmem:[#allocation2 + $0x128] sm:$0xff]
    %v83 = vld [vmem:[#allocation2 + $0x130] sm:$0xff]
    %v84 = vld [vmem:[#allocation2 + $0x138] sm:$0xff]
    %v85 = vld [vmem:[#allocation2 + $0x140] sm:$0xff]
    %v86 = vld [vmem:[#allocation2 + $0x148] sm:$0xff]
    %v87 = vld [vmem:[#allocation2 + $0x150] sm:$0xff]
    %v88 = vld [vmem:[#allocation2 + $0x158] sm:$0xff]
    %v89 = vld [vmem:[#allocation2 + $0x160] sm:$0xff]
    %v90 = vld [vmem:[#allocation2 + $0x168] sm:$0xff]
    %v91 = vld [vmem:[#allocation2 + $0x170] sm:$0xff]
    %v92 = vld [vmem:[#allocation2 + $0x178] sm:$0xff]
    %v93 = vld [vmem:[#allocation2 + $0x180] sm:$0xff]
    %v94 = vld [vmem:[#allocation2 + $0x188] sm:$0xff]
    %v95 = vld [vmem:[#allocation2 + $0x190] sm:$0xff]
    %v96 = vld [vmem:[#allocation2 + $0x198] sm:$0xff]
    %v97 = vld [vmem:[#allocation2 + $0x1a0] sm:$0xff]
    %v98 = vld [vmem:[#allocation2 + $0x1a8] sm:$0xff]
    %v99 = vld [vmem:[#allocation2 + $0x1b0] sm:$0xff]
    %v100 = vld [vmem:[#allocation2 + $0x1b8] sm:$0xff]
    %v101 = vld [vmem:[#allocation2 + $0x1c0] sm:$0xff]
    %v102 = vld [vmem:[#allocation2 + $0x1c8] sm:$0xff]
    %v103 = vld [vmem:[#allocation2 + $0x1d0] sm:$0xff]
    %v104 = vld [vmem:[#allocation2 + $0x1d8] sm:$0xff]
    %v105 = vld [vmem:[#allocation2 + $0x1e0] sm:$0xff]
    %v106 = vld [vmem:[#allocation2 + $0x1e8] sm:$0xff]
    %v107 = vld [vmem:[#allocation2 + $0x1f0] sm:$0xff]
    %v108 = vld [vmem:[#allocation2 + $0x1f8] sm:$0xff]
    %v109 = vld [vmem:[#allocation2 + $0x200] sm:$0xff]
    %v110 = vld [vmem:[#allocation2 + $0x208] sm:$0xff]
    %v111 = vld [vmem:[#allocation2 + $0x210] sm:$0xff]
    %v112 = vld [vmem:[#allocation2 + $0x218] sm:$0xff]
    %v113 = vld [vmem:[#allocation2 + $0x220] sm:$0xff]
    %v114 = vld [vmem:[#allocation2 + $0x228] sm:$0xff]
    %v115 = vld [vmem:[#allocation2 + $0x230] sm:$0xff]
    %v116 = vld [vmem:[#allocation2 + $0x238] sm:$0xff]
    %v117 = vld [vmem:[#allocation2 + $0x240] sm:$0xff]
    %v118 = vld [vmem:[#allocation2 + $0x248] sm:$0xff]
    %v119 = vld [vmem:[#allocation2 + $0x250] sm:$0xff]
    %v120 = vld [vmem:[#allocation2 + $0x258] sm:$0xff]
    %v121 = vld [vmem:[#allocation2 + $0x260] sm:$0xff]
    %v122 = vld [vmem:[#allocation2 + $0x268] sm:$0xff]
    %v123 = vld [vmem:[#allocation2 + $0x270] sm:$0xff]
    %v124 = vld [vmem:[#allocation2 + $0x278] sm:$0xff]
    %v125 = vld [vmem:[#allocation2 + $0x280] sm:$0xff]
    %v126 = vld [vmem:[#allocation2 + $0x288] sm:$0xff]
    %v127 = vld [vmem:[#allocation2 + $0x290] sm:$0xff]
    %v128 = vld [vmem:[#allocation2 + $0x298] sm:$0xff]
    %v129 = vld [vmem:[#allocation2 + $0x2a0] sm:$0xff]
    %v130 = vld [vmem:[#allocation2 + $0x2a8] sm:$0xff]
    %v131 = vld [vmem:[#allocation2 + $0x2b0] sm:$0xff]
    %v132 = vld [vmem:[#allocation2 + $0x2b8] sm:$0xff]
    %v133 = vld [vmem:[#allocation2 + $0x2c0] sm:$0xff]
    %v134 = vld [vmem:[#allocation2 + $0x2c8] sm:$0xff]
    %v135 = vld [vmem:[#allocation2 + $0x2d0] sm:$0xff]
    %v136 = vld [vmem:[#allocation2 + $0x2d8] sm:$0xff]
    %v137 = vld [vmem:[#allocation2 + $0x2e0] sm:$0xff]
    %v138 = vld [vmem:[#allocation2 + $0x2e8] sm:$0xff]
    %v139 = vld [vmem:[#allocation2 + $0x2f0] sm:$0xff]
    %v140 = vld [vmem:[#allocation2 + $0x2f8] sm:$0xff]
    %v141 = vld [vmem:[#allocation2 + $0x300] sm:$0xff]
    %v142 = vld [vmem:[#allocation2 + $0x308] sm:$0xff]
    %v143 = vld [vmem:[#allocation2 + $0x310] sm:$0xff]
    %v144 = vld [vmem:[#allocation2 + $0x318] sm:$0xff]
    %v145 = vld [vmem:[#allocation2 + $0x320] sm:$0xff]
    %v146 = vld [vmem:[#allocation2 + $0x328] sm:$0xff]
    %v147 = vld [vmem:[#allocation2 + $0x330] sm:$0xff]
    %v148 = vld [vmem:[#allocation2 + $0x338] sm:$0xff]
    %v149 = vld [vmem:[#allocation2 + $0x340] sm:$0xff]
    %v150 = vld [vmem:[#allocation2 + $0x348] sm:$0xff]
    %v151 = vld [vmem:[#allocation2 + $0x350] sm:$0xff]
    %v152 = vld [vmem:[#allocation2 + $0x358] sm:$0xff]
    %v153 = vld [vmem:[#allocation2 + $0x360] sm:$0xff]
    %v154 = vld [vmem:[#allocation2 + $0x368] sm:$0xff]
    %v155 = vld [vmem:[#allocation2 + $0x370] sm:$0xff]
    %v156 = vld [vmem:[#allocation2 + $0x378] sm:$0xff]
    %v157 = vld [vmem:[#allocation2 + $0x380] sm:$0xff]
    %v158 = vld [vmem:[#allocation2 + $0x388] sm:$0xff]
    %v159 = vld [vmem:[#allocation2 + $0x390] sm:$0xff]
    %v160 = vld [vmem:[#allocation2 + $0x398] sm:$0xff]
    %v161 = vld [vmem:[#allocation2 + $0x3a0] sm:$0xff]
    %v162 = vld [vmem:[#allocation2 + $0x3a8] sm:$0xff]
    %v163 = vld [vmem:[#allocation2 + $0x3b0] sm:$0xff]
    %v164 = vld [vmem:[#allocation2 + $0x3b8] sm:$0xff]
    %v165 = vld [vmem:[#allocation2 + $0x3c0] sm:$0xff]
    %v166 = vld [vmem:[#allocation2 + $0x3c8] sm:$0xff]
    %v167 = vld [vmem:[#allocation2 + $0x3d0] sm:$0xff]
    %v168 = vld [vmem:[#allocation2 + $0x3d8] sm:$0xff]
    %v169 = vld [vmem:[#allocation2 + $0x3e0] sm:$0xff]
    %v170 = vld [vmem:[#allocation2 + $0x3e8] sm:$0xff]
    %v171 = vld [vmem:[#allocation2 + $0x3f0] sm:$0xff]
    %v172 = vld [vmem:[#allocation2 + $0x3f8] sm:$0xff]
    %v173 = vsub.f32 %v45, 1.0
    %v174 = vsub.f32 %v46, 1.0
    %v175 = vsub.f32 %v47, 1.0
    %v176 = vsub.f32 %v48, 1.0
    %v177 = vsub.f32 %v49, 1.0
    %v178 = vsub.f32 %v50, 1.0
    %v179 = vsub.f32 %v51, 1.0
    %v180 = vsub.f32 %v52, 1.0
    %v181 = vsub.f32 %v53, 1.0
    %v182 = vsub.f32 %v54, 1.0
    %v183 = vsub.f32 %v55, 1.0
    %v184 = vsub.f32 %v56, 1.0
    %v185 = vsub.f32 %v57, 1.0
    %v186 = vsub.f32 %v58, 1.0
    %v187 = vsub.f32 %v59, 1.0
    %v188 = vsub.f32 %v60, 1.0
    %v189 = vsub.f32 %v61, 1.0
    %v190 = vsub.f32 %v62, 1.0
    %v191 = vsub.f32 %v63, 1.0
    %v192 = vsub.f32 %v64, 1.0
    %v193 = vsub.f32 %v65, 1.0
    %v194 = vsub.f32 %v66, 1.0
    %v195 = vsub.f32 %v67, 1.0
    %v196 = vsub.f32 %v68, 1.0
    %v197 = vsub.f32 %v69, 1.0
    %v198 = vsub.f32 %v70, 1.0
    %v199 = vsub.f32 %v71, 1.0
    %v200 = vsub.f32 %v72, 1.0
    %v201 = vsub.f32 %v73, 1.0
    %v202 = vsub.f32 %v74, 1.0
    %v203 = vsub.f32 %v75, 1.0
    %v204 = vsub.f32 %v76, 1.0
    %v205 = vsub.f32 %v77, 1.0
    %v206 = vsub.f32 %v78, 1.0
    %v207 = vsub.f32 %v79, 1.0
    %v208 = vsub.f32 %v80, 1.0
    %v209 = vsub.f32 %v81, 1.0
    %v210 = vsub.f32 %v82, 1.0
    %v211 = vsub.f32 %v83, 1.0
    %v212 = vsub.f32 %v84, 1.0
    %v213 = vsub.f32 %v85, 1.0
    %v214 = vsub.f32 %v86, 1.0
    %v215 = vsub.f32 %v87, 1.0
    %v216 = vsub.f32 %v88, 1.0
    %v217 = vsub.f32 %v89, 1.0
    %v218 = vsub.f32 %v90, 1.0
    %v219 = vsub.f32 %v91, 1.0
    %v220 = vsub.f32 %v92, 1.0
    %v221 = vsub.f32 %v93, 1.0
    %v222 = vsub.f32 %v94, 1.0
    %v223 = vsub.f32 %v95, 1.0
    %v224 = vsub.f32 %v96, 1.0
    %v225 = vsub.f32 %v97, 1.0
    %v226 = vsub.f32 %v98, 1.0
    %v227 = vsub.f32 %v99, 1.0
    %v228 = vsub.f32 %v100, 1.0
    %v229 = vsub.f32 %v101, 1.0
    %v230 = vsub.f32 %v102, 1.0
    %v231 = vsub.f32 %v103, 1.0
    %v232 = vsub.f32 %v104, 1.0
    %v233 = vsub.f32 %v105, 1.0
    %v234 = vsub.f32 %v106, 1.0
    %v235 = vsub.f32 %v107, 1.0
    %v236 = vsub.f32 %v108, 1.0
    %v237 = vsub.f32 %v109, 1.0
    %v238 = vsub.f32 %v110, 1.0
    %v239 = vsub.f32 %v111, 1.0
    %v240 = vsub.f32 %v112, 1.0
    %v241 = vsub.f32 %v113, 1.0
    %v242 = vsub.f32 %v114, 1.0
    %v243 = vsub.f32 %v115, 1.0
    %v244 = vsub.f32 %v116, 1.0
    %v245 = vsub.f32 %v117, 1.0
    %v246 = vsub.f32 %v118, 1.0
    %v247 = vsub.f32 %v119, 1.0
    %v248 = vsub.f32 %v120, 1.0
    %v249 = vsub.f32 %v121, 1.0
    %v250 = vsub.f32 %v122, 1.0
    %v251 = vsub.f32 %v123, 1.0
    %v252 = vsub.f32 %v124, 1.0
    %v253 = vsub.f32 %v125, 1.0
    %v254 = vsub.f32 %v126, 1.0
    %v255 = vsub.f32 %v127, 1.0
    %v256 = vsub.f32 %v128, 1.0
    %v257 = vsub.f32 %v129, 1.0
    %v258 = vsub.f32 %v130, 1.0
    %v259 = vsub.f32 %v131, 1.0
    %v260 = vsub.f32 %v132, 1.0
    %v261 = vsub.f32 %v133, 1.0
    %v262 = vsub.f32 %v134, 1.0
    %v263 = vsub.f32 %v135, 1.0
    %v264 = vsub.f32 %v136, 1.0
    %v265 = vsub.f32 %v137, 1.0
    %v266 = vsub.f32 %v138, 1.0
    %v267 = vsub.f32 %v139, 1.0
    %v268 = vsub.f32 %v140, 1.0
    %v269 = vsub.f32 %v141, 1.0
    %v270 = vsub.f32 %v142, 1.0
    %v271 = vsub.f32 %v143, 1.0
    %v272 = vsub.f32 %v144, 1.0
    %v273 = vsub.f32 %v145, 1.0
    %v274 = vsub.f32 %v146, 1.0
    %v275 = vsub.f32 %v147, 1.0
    %v276 = vsub.f32 %v148, 1.0
    %v277 = vsub.f32 %v149, 1.0
    %v278 = vsub.f32 %v150, 1.0
    %v279 = vsub.f32 %v151, 1.0
    %v280 = vsub.f32 %v152, 1.0
    %v281 = vsub.f32 %v153, 1.0
    %v282 = vsub.f32 %v154, 1.0
    %v283 = vsub.f32 %v155, 1.0
    %v284 = vsub.f32 %v156, 1.0
    %v285 = vsub.f32 %v157, 1.0
    %v286 = vsub.f32 %v158, 1.0
    %v287 = vsub.f32 %v159, 1.0
    %v288 = vsub.f32 %v160, 1.0
    %v289 = vsub.f32 %v161, 1.0
    %v290 = vsub.f32 %v162, 1.0
    %v291 = vsub.f32 %v163, 1.0
    %v292 = vsub.f32 %v164, 1.0
    %v293 = vsub.f32 %v165, 1.0
    %v294 = vsub.f32 %v166, 1.0
    %v295 = vsub.f32 %v167, 1.0
    %v296 = vsub.f32 %v168, 1.0
    %v297 = vsub.f32 %v169, 1.0
    %v298 = vsub.f32 %v170, 1.0
    %v299 = vsub.f32 %v171, 1.0
    %v300 = vsub.f32 %v172, 1.0
    %v301 = vmul.f32 %v173, %v173
    %v302 = vmul.f32 %v174, %v174
    %v303 = vmul.f32 %v175, %v175
    %v304 = vmul.f32 %v176, %v176
    %v305 = vmul.f32 %v177, %v177
    %v306 = vmul.f32 %v178, %v178
    %v307 = vmul.f32 %v179, %v179
    %v308 = vmul.f32 %v180, %v180
    %v309 = vmul.f32 %v181, %v181
    %v310 = vmul.f32 %v182, %v182
    %v311 = vmul.f32 %v183, %v183
    %v312 = vmul.f32 %v184, %v184
    %v313 = vmul.f32 %v185, %v185
    %v314 = vmul.f32 %v186, %v186
    %v315 = vmul.f32 %v187, %v187
    %v316 = vmul.f32 %v188, %v188
    %v317 = vmul.f32 %v189, %v189
    %v318 = vmul.f32 %v190, %v190
    %v319 = vmul.f32 %v191, %v191
    %v320 = vmul.f32 %v192, %v192
    %v321 = vmul.f32 %v193, %v193
    %v322 = vmul.f32 %v194, %v194
    %v323 = vmul.f32 %v195, %v195
    %v324 = vmul.f32 %v196, %v196
    %v325 = vmul.f32 %v197, %v197
    %v326 = vmul.f32 %v198, %v198
    %v327 = vmul.f32 %v199, %v199
    %v328 = vmul.f32 %v200, %v200
    %v329 = vmul.f32 %v201, %v201
    %v330 = vmul.f32 %v202, %v202
    %v331 = vmul.f32 %v203, %v203
    %v332 = vmul.f32 %v204, %v204
    %v333 = vmul.f32 %v205, %v205
    %v334 = vmul.f32 %v206, %v206
    %v335 = vmul.f32 %v207, %v207
    %v336 = vmul.f32 %v208, %v208
    %v337 = vmul.f32 %v209, %v209
    %v338 = vmul.f32 %v210, %v210
    %v339 = vmul.f32 %v211, %v211
    %v340 = vmul.f32 %v212, %v212
    %v341 = vmul.f32 %v213, %v213
    %v342 = vmul.f32 %v214, %v214
    %v343 = vmul.f32 %v215, %v215
    %v344 = vmul.f32 %v216, %v216
    %v345 = vmul.f32 %v217, %v217
    %v346 = vmul.f32 %v218, %v218
    %v347 = vmul.f32 %v219, %v219
    %v348 = vmul.f32 %v220, %v220
    %v349 = vmul.f32 %v221, %v221
    %v350 = vmul.f32 %v222, %v222
    %v351 = vmul.f32 %v223, %v223
    %v352 = vmul.f32 %v224, %v224
    %v353 = vmul.f32 %v225, %v225
    %v354 = vmul.f32 %v226, %v226
    %v355 = vmul.f32 %v227, %v227
    %v356 = vmul.f32 %v228, %v228
    %v357 = vmul.f32 %v229, %v229
    %v358 = vmul.f32 %v230, %v230
    %v359 = vmul.f32 %v231, %v231
    %v360 = vmul.f32 %v232, %v232
    %v361 = vmul.f32 %v233, %v233
    %v362 = vmul.f32 %v234, %v234
    %v363 = vmul.f32 %v235, %v235
    %v364 = vmul.f32 %v236, %v236
    %v365 = vmul.f32 %v237, %v237
    %v366 = vmul.f32 %v238, %v238
    %v367 = vmul.f32 %v239, %v239
    %v368 = vmul.f32 %v240, %v240
    %v369 = vmul.f32 %v241, %v241
    %v370 = vmul.f32 %v242, %v242
    %v371 = vmul.f32 %v243, %v243
    %v372 = vmul.f32 %v244, %v244
    %v373 = vmul.f32 %v245, %v245
    %v374 = vmul.f32 %v246, %v246
    %v375 = vmul.f32 %v247, %v247
    %v376 = vmul.f32 %v248, %v248
    %v377 = vmul.f32 %v249, %v249
    %v378 = vmul.f32 %v250, %v250
    %v379 = vmul.f32 %v251, %v251
    %v380 = vmul.f32 %v252, %v252
    %v381 = vmul.f32 %v253, %v253
    %v382 = vmul.f32 %v254, %v254
    %v383 = vmul.f32 %v255, %v255
    %v384 = vmul.f32 %v256, %v256
    %v385 = vmul.f32 %v257, %v257
    %v386 = vmul.f32 %v258, %v258
    %v387 = vmul.f32 %v259, %v259
    %v388 = vmul.f32 %v260, %v260
    %v389 = vmul.f32 %v261, %v261
    %v390 = vmul.f32 %v262, %v262
    %v391 = vmul.f32 %v263, %v263
    %v392 = vmul.f32 %v264, %v264
    %v393 = vmul.f32 %v265, %v265
    %v394 = vmul.f32 %v266, %v266
    %v395 = vmul.f32 %v267, %v267
    %v396 = vmul.f32 %v268, %v268
    %v397 = vmul.f32 %v269, %v269
    %v398 = vmul.f32 %v270, %v270
    %v399 = vmul.f32 %v271, %v271
    %v400 = vmul.f32 %v272, %v272
    %v401 = vmul.f32 %v273, %v273
    %v402 = vmul.f32 %v274, %v274
    %v403 = vmul.f32 %v275, %v275
    %v404 = vmul.f32 %v276, %v276
    %v405 = vmul.f32 %v277, %v277
    %v406 = vmul.f32 %v278, %v278
    %v407 = vmul.f32 %v279, %v279
    %v408 = vmul.f32 %v280, %v280
    %v409 = vmul.f32 %v281, %v281
    %v410 = vmul.f32 %v282, %v282
    %v411 = vmul.f32 %v283, %v283
    %v412 = vmul.f32 %v284, %v284
    %v413 = vmul.f32 %v285, %v285
    %v414 = vmul.f32 %v286, %v286
    %v415 = vmul.f32 %v287, %v287
    %v416 = vmul.f32 %v288, %v288
    %v417 = vmul.f32 %v289, %v289
    %v418 = vmul.f32 %v290, %v290
    %v419 = vmul.f32 %v291, %v291
    %v420 = vmul.f32 %v292, %v292
    %v421 = vmul.f32 %v293, %v293
    %v422 = vmul.f32 %v294, %v294
    %v423 = vmul.f32 %v295, %v295
    %v424 = vmul.f32 %v296, %v296
    %v425 = vmul.f32 %v297, %v297
    %v426 = vmul.f32 %v298, %v298
    %v427 = vmul.f32 %v299, %v299
    %v428 = vmul.f32 %v300, %v300
    %v429 = vld [vmem:[#allocation5] sm:$0xff]
    %v430 = vld [vmem:[#allocation5 + $0x8] sm:$0xff]
    %v431 = vld [vmem:[#allocation5 + $0x10] sm:$0xff]
    %v432 = vld [vmem:[#allocation5 + $0x18] sm:$0xff]
    %v433 = vld [vmem:[#allocation5 + $0x20] sm:$0xff]
    %v434 = vld [vmem:[#allocation5 + $0x28] sm:$0xff]
    %v435 = vld [vmem:[#allocation5 + $0x30] sm:$0xff]
    %v436 = vld [vmem:[#allocation5 + $0x38] sm:$0xff]
    %v437 = vadd.f32 %v301, %v309
    %v438 = vadd.f32 %v437, %v317
    %v439 = vadd.f32 %v438, %v325
    %v440 = vadd.f32 %v439, %v333
    %v441 = vadd.f32 %v440, %v341
    %v442 = vadd.f32 %v441, %v349
    %v443 = vadd.f32 %v442, %v357
    %v444 = vadd.f32 %v443, %v365
    %v445 = vadd.f32 %v444, %v373
    %v446 = vadd.f32 %v445, %v381
    %v447 = vadd.f32 %v446, %v389
    %v448 = vadd.f32 %v447, %v397
    %v449 = vadd.f32 %v448, %v405
    %v450 = vadd.f32 %v449, %v413
    %v451 = vadd.f32 %v450, %v421
    %v452 = vadd.f32 %v302, %v310
    %v453 = vadd.f32 %v452, %v318
    %v454 = vadd.f32 %v453, %v326
    %v455 = vadd.f32 %v454, %v334
    %v456 = vadd.f32 %v455, %v342
    %v457 = vadd.f32 %v456, %v350
    %v458 = vadd.f32 %v457, %v358
    %v459 = vadd.f32 %v458, %v366
    %v460 = vadd.f32 %v459, %v374
    %v461 = vadd.f32 %v460, %v382
    %v462 = vadd.f32 %v461, %v390
    %v463 = vadd.f32 %v462, %v398
    %v464 = vadd.f32 %v463, %v406
    %v465 = vadd.f32 %v464, %v414
    %v466 = vadd.f32 %v465, %v422
    %v467 = vadd.f32 %v303, %v311
    %v468 = vadd.f32 %v467, %v319
    %v469 = vadd.f32 %v468, %v327
    %v470 = vadd.f32 %v469, %v335
    %v471 = vadd.f32 %v470, %v343
    %v472 = vadd.f32 %v471, %v351
    %v473 = vadd.f32 %v472, %v359
    %v474 = vadd.f32 %v473, %v367
    %v475 = vadd.f32 %v474, %v375
    %v476 = vadd.f32 %v475, %v383
    %v477 = vadd.f32 %v476, %v391
    %v478 = vadd.f32 %v477, %v399
    %v479 = vadd.f32 %v478, %v407
    %v480 = vadd.f32 %v479, %v415
    %v481 = vadd.f32 %v480, %v423
    %v482 = vadd.f32 %v304, %v312
    %v483 = vadd.f32 %v482, %v320
    %v484 = vadd.f32 %v483, %v328
    %v485 = vadd.f32 %v484, %v336
    %v486 = vadd.f32 %v485, %v344
    %v487 = vadd.f32 %v486, %v352
    %v488 = vadd.f32 %v487, %v360
    %v489 = vadd.f32 %v488, %v368
    %v490 = vadd.f32 %v489, %v376
    %v491 = vadd.f32 %v490, %v384
    %v492 = vadd.f32 %v491, %v392
    %v493 = vadd.f32 %v492, %v400
    %v494 = vadd.f32 %v493, %v408
    %v495 = vadd.f32 %v494, %v416
    %v496 = vadd.f32 %v495, %v424
    %v497 = vadd.f32 %v305, %v313
    %v498 = vadd.f32 %v497, %v321
    %v499 = vadd.f32 %v498, %v329
    %v500 = vadd.f32 %v499, %v337
    %v501 = vadd.f32 %v500, %v345
    %v502 = vadd.f32 %v501, %v353
    %v503 = vadd.f32 %v502, %v361
    %v504 = vadd.f32 %v503, %v369
    %v505 = vadd.f32 %v504, %v377
    %v506 = vadd.f32 %v505, %v385
    %v507 = vadd.f32 %v506, %v393
    %v508 = vadd.f32 %v507, %v401
    %v509 = vadd.f32 %v508, %v409
    %v510 = vadd.f32 %v509, %v417
    %v511 = vadd.f32 %v510, %v425
    %v512 = vadd.f32 %v306, %v314
    %v513 = vadd.f32 %v512, %v322
    %v514 = vadd.f32 %v513, %v330
    %v515 = vadd.f32 %v514, %v338
    %v516 = vadd.f32 %v515, %v346
    %v517 = vadd.f32 %v516, %v354
    %v518 = vadd.f32 %v517, %v362
    %v519 = vadd.f32 %v518, %v370
    %v520 = vadd.f32 %v519, %v378
    %v521 = vadd.f32 %v520, %v386
    %v522 = vadd.f32 %v521, %v394
    %v523 = vadd.f32 %v522, %v402
    %v524 = vadd.f32 %v523, %v410
    %v525 = vadd.f32 %v524, %v418
    %v526 = vadd.f32 %v525, %v426
    %v527 = vadd.f32 %v307, %v315
    %v528 = vadd.f32 %v527, %v323
    %v529 = vadd.f32 %v528, %v331
    %v530 = vadd.f32 %v529, %v339
    %v531 = vadd.f32 %v530, %v347
    %v532 = vadd.f32 %v531, %v355
    %v533 = vadd.f32 %v532, %v363
    %v534 = vadd.f32 %v533, %v371
    %v535 = vadd.f32 %v534, %v379
    %v536 = vadd.f32 %v535, %v387
    %v537 = vadd.f32 %v536, %v395
    %v538 = vadd.f32 %v537, %v403
    %v539 = vadd.f32 %v538, %v411
    %v540 = vadd.f32 %v539, %v419
    %v541 = vadd.f32 %v540, %v427
    %v542 = vadd.f32 %v308, %v316
    %v543 = vadd.f32 %v542, %v324
    %v544 = vadd.f32 %v543, %v332
    %v545 = vadd.f32 %v544, %v340
    %v546 = vadd.f32 %v545, %v348
    %v547 = vadd.f32 %v546, %v356
    %v548 = vadd.f32 %v547, %v364
    %v549 = vadd.f32 %v548, %v372
    %v550 = vadd.f32 %v549, %v380
    %v551 = vadd.f32 %v550, %v388
    %v552 = vadd.f32 %v551, %v396
    %v553 = vadd.f32 %v552, %v404
    %v554 = vadd.f32 %v553, %v412
    %v555 = vadd.f32 %v554, %v420
    %v556 = vadd.f32 %v555, %v428
    %v557 = vadd.f32 %v429, %v451
    %v558 = vadd.f32 %v430, %v466
    %v559 = vadd.f32 %v431, %v481
    %v560 = vadd.f32 %v432, %v496
    %v561 = vadd.f32 %v433, %v511
    %v562 = vadd.f32 %v434, %v526
    %v563 = vadd.f32 %v435, %v541
    %v564 = vadd.f32 %v436, %v556
    %565 = vst [vmem:[#allocation5] sm:$0xff] %v557
    %566 = vst [vmem:[#allocation5 + $0x8] sm:$0xff] %v558
    %567 = vst [vmem:[#allocation5 + $0x10] sm:$0xff] %v559
    %568 = vst [vmem:[#allocation5 + $0x18] sm:$0xff] %v560
    %569 = vst [vmem:[#allocation5 + $0x20] sm:$0xff] %v561
    %570 = vst [vmem:[#allocation5 + $0x28] sm:$0xff] %v562
    %571 = vst [vmem:[#allocation5 + $0x30] sm:$0xff] %v563
    %572 = vst [vmem:[#allocation5 + $0x38] sm:$0xff] %v564
    // Predicated region
    $region14: #{tpu_custom_call.1} parent=1 // pred_check
      _
    $region15: #{tpu_custom_call.1} parent=1 // pred_check_branch
      %574 = sbr.rel (0) target = $region17
    $region16: #{tpu_custom_call.1} parent=1 // pred_region
      %s576 = ssub.s32 1024, 1024
      %577 = vsyncadd [#allocation4], %s576
      %s578 = sshll.u32 [#allocation5], 4
      %s579 = int_to_ptr.vmem [resolvable:$true] %s578
      %584 = dma.vmem_to_hbm [thread:$0]  %s579, 1024, %s1, [#allocation4], 128, 128, 8
    $region17: #{tpu_custom_call.1} parent=1 // pred_fallthru
      _
    // Predicated region
    $region18: #{tpu_custom_call.1} parent=1 // pred_check
      _
    $region19: #{tpu_custom_call.1} parent=1 // pred_check_branch
      %586 = sbr.rel (0) target = $region21
    $region20: #{tpu_custom_call.1} parent=1 // pred_region
      %587 = dma.done [#allocation4], 1024
    $region21: #{tpu_custom_call.1} parent=1 // pred_fallthru
      _
    %588 = vsyncpa [#allocation3], 1
    %589 = vsyncpa [#allocation4], 1

</llo_original>
